<compile_context>
chip_gen: v5e
topology: v5e:2x2
jax: 0.10.0
libtpu: 0.0.40
codegen_flags: <defaults>
</compile_context>

<pallas_src>
import functools

import jax
import jax.numpy as jnp
from jax import lax
from jax.experimental import pallas as pl
from jax.experimental.pallas import tpu as pltpu


def _round_up(n, m):
    return ((n + m - 1) // m) * m


def _pick_h_chunk(h_p, max_chunk=512):
    # Largest multiple-of-128 divisor of h_p that is <= max_chunk.
    hc = min(h_p, max_chunk)
    while h_p % hc:
        hc -= 128
    return hc


def mlp_kernel(x_ref, w1_ref, b1_ref, w2_ref, b2_ref, o_ref, *, h_chunk):
    """One batch tile of: out = sigmoid(x @ W1 + b1) @ W2 + b2."""
    tm = x_ref.shape[0]
    C_p = o_ref.shape[1]
    H_p = w1_ref.shape[1]
    n_chunks = H_p // h_chunk
    compute_dtype = w1_ref.dtype

    # Cast the streamed x tile once (bf16 for the MXU); hoisted out of the loop.
    x = x_ref[...].astype(compute_dtype)

    def chunk_body(c, acc):
        off = c * h_chunk
        if not isinstance(off, int):
            off = pl.multiple_of(off, h_chunk)
        # fc1 chunk on the MXU, f32 accumulation.
        h = jnp.dot(x, w1_ref[:, pl.ds(off, h_chunk)],
                    preferred_element_type=jnp.float32)
        h = h + b1_ref[:, pl.ds(off, h_chunk)]          # f32 bias add (VPU)
        # sigmoid via tanh: a single EUP push, f32 (v5e-safe), stays in [0,1].
        h = 0.5 * (jnp.tanh(0.5 * h) + 1.0)
        h = h.astype(compute_dtype)                     # bf16 for 2nd matmul
        # fc2 partial: accumulate into the (tm, C_p) f32 carry.
        return acc + jnp.dot(h, w2_ref[pl.ds(off, h_chunk), :],
                             preferred_element_type=jnp.float32)

    acc = jnp.zeros((tm, C_p), jnp.float32)
    if n_chunks <= 8:
        # Short fixed trip count: unroll (constant chunk offsets).
        for c in range(n_chunks):
            acc = chunk_body(c, acc)
    else:
        acc = lax.fori_loop(0, n_chunks, chunk_body, acc)

    # Lane-dense (C_p % 128 == 0) unmasked store.
    o_ref[...] = (acc + b2_ref[...]).astype(o_ref.dtype)


def prepare_params(w1_t, b1, w2_t, b2, *, compute_dtype=jnp.bfloat16):
    """Pad/cast the weights ONCE; cache the result across forward calls.

    w1_t: (In, H), b1: (H,)/(1, H), w2_t: (H, C), b2: (C,)/(1, C) -- the
    transpose of PyTorch nn.Linear's (out, in) layout, so the kernel computes
    x @ W1 + b1 -> sigmoid -> h @ W2 + b2.
    """
    In, H = w1_t.shape
    C = w2_t.shape[1]
    # Lane-dense padding of H / C (lane dims) to multiples of 128.  The
    # contraction dim In is left UNpadded: a full-extent block is legal, so x
    # needs no wrapper-side pad/copy at all.
    # NOTE: for very large H/C on v6e/v7x, 256-aligned sub-tiles (with a K
    # grid axis if the weights stop fitting VMEM) feed the 2x256x256 MXU
    # better; at small/medium sizes 128 alignment is enough.
    H_p = _round_up(H, 128)
    C_p = _round_up(C, 128)
    # The padding MUST stay exactly zero: padded b1 columns are 0, so padded
    # hidden columns are sigmoid(0)=0.5 and are killed by the zero padded W2
    # rows; padded W2 columns / b2 entries only touch output columns that are
    # sliced away (or are exact zeros if kept).
    w1_p = jnp.zeros((In, H_p), compute_dtype).at[:, :H].set(
        w1_t.astype(compute_dtype))
    w2_p = jnp.zeros((H_p, C_p), compute_dtype).at[:H, :C].set(
        w2_t.astype(compute_dtype))
    b1_p = jnp.zeros((1, H_p), jnp.float32).at[:, :H].set(
        jnp.reshape(b1, (1, H)).astype(jnp.float32))
    b2_p = jnp.zeros((1, C_p), jnp.float32).at[:, :C].set(
        jnp.reshape(b2, (1, C)).astype(jnp.float32))
    return dict(w1=w1_p, b1=b1_p, w2=w2_p, b2=b2_p, In=In, H=H, C=C)


# Per-TensorCore working-set target; leaves pipeline headroom on v7x (64 MiB).
_VMEM_BUDGET = 48 * 1024 * 1024


def feedforward_nn(x, params, *, block_b=512, out_dtype=None,
                   single_buffer_weights=True):
    """x: (B, In) -> (B, C).  `params` comes from prepare_params()."""
    B, In = x.shape
    assert In == params["In"], "feature dim mismatch"
    w1_p, b1_p, w2_p, b2_p = params["w1"], params["b1"], params["w2"], params["b2"]
    H_p, C_p, C = w1_p.shape[1], w2_p.shape[1], params["C"]
    if out_dtype is None:
        # Pass jnp.bfloat16 here to halve the output HBM writeback.
        out_dtype = x.dtype
    compute_dtype = w1_p.dtype

    x_itemsize = jnp.dtype(x.dtype).itemsize
    cd_itemsize = jnp.dtype(compute_dtype).itemsize
    out_itemsize = jnp.dtype(out_dtype).itemsize
    h_chunk = _pick_h_chunk(H_p)

    # ---- VMEM budget -> batch tile size -----------------------------------
    n_wbuf = 1 if single_buffer_weights else 2
    fixed = n_wbuf * ((w1_p.size + w2_p.size) * cd_itemsize
                      + (b1_p.size + b2_p.size) * 4)
    per_row = (2 * In * x_itemsize            # x tile, double-buffered
               + 2 * C_p * out_itemsize       # out tile, double-buffered
               + h_chunk * (4 + cd_itemsize)  # f32 hidden chunk + bf16 copy
               + C_p * 4)                     # f32 fc2 accumulator
    tm_cap = max(8, ((_VMEM_BUDGET - fixed) // max(per_row, 1)) // 8 * 8)

    block_b = max(8, (block_b // 8) * 8)
    B8 = _round_up(B, 8)
    tm = max(8, min(block_b, B8, tm_cap))
    # v7x megacore: the "parallel" batch axis only uses the 2nd TensorCore if
    # there are >= 2 grid steps, so don't let one tile swallow the batch.
    if B8 // tm < 2 and B8 >= 16:
        tm = min(tm, _round_up(-(-B8 // 2), 8))
    B_p = _round_up(B8, tm)
    grid = (B_p // tm,)

    # No wrapper-side HBM pass on x unless the batch itself needs padding.
    x_in = x
    if B_p != B:
        x_in = jnp.zeros((B_p, In), x.dtype).at[:B].set(x)

    est_vmem = fixed + per_row * tm
    vmem_limit = int(min(64 * 1024 * 1024,
                         max(32 * 1024 * 1024, int(est_vmem * 1.5) + (2 << 20))))
    # TODO(synk): if the padded weights alone exceed the per-core VMEM budget,
    # add K/N grid axes ("arbitrary") with a VMEM f32 accumulator instead of
    # keeping W1/W2 fully resident.

    cost = pl.CostEstimate(
        flops=2 * B_p * In * H_p + 2 * B_p * H_p * C_p,
        transcendentals=B_p * H_p,
        bytes_accessed=(x_in.size * x_itemsize
                        + (w1_p.size + w2_p.size) * cd_itemsize
                        + (b1_p.size + b2_p.size) * 4
                        + B_p * C_p * out_itemsize),
    )

    def resident_spec(shape):
        # Constant index_map => block is resident across the grid; request a
        # single buffer so the weights don't cost 2x their size in VMEM.
        if single_buffer_weights:
            try:
                return pl.BlockSpec(shape, lambda i: (0, 0),
                                    pipeline_mode=pl.Buffered(1))
            except Exception:  # pipeline_mode / Buffered(1) unsupported here
                pass
        return pl.BlockSpec(shape, lambda i: (0, 0))

    call = pl.pallas_call(
        functools.partial(mlp_kernel, h_chunk=h_chunk),
        out_shape=jax.ShapeDtypeStruct((B_p, C_p), out_dtype),
        grid_spec=pltpu.PrefetchScalarGridSpec(
            num_scalar_prefetch=0,
            grid=grid,
            in_specs=[
                pl.BlockSpec((tm, In), lambda i: (i, 0)),  # x: batch-streamed
                resident_spec((In, H_p)),                  # W1: resident
                resident_spec((1, H_p)),                   # b1: resident
                resident_spec((H_p, C_p)),                 # W2: resident
                resident_spec((1, C_p)),                   # b2: resident
            ],
            out_specs=pl.BlockSpec((tm, C_p), lambda i: (i, 0)),
        ),
        compiler_params=pltpu.CompilerParams(
            dimension_semantics=("parallel",),
            vmem_limit_bytes=vmem_limit),
        cost_estimate=cost,
    )

    try:
        out_p = call(x_in, w1_p, b1_p, w2_p, b2_p)
    except Exception:
        if not single_buffer_weights:
            raise
        # Safety fallback: retry with default double-buffered resident blocks.
        return feedforward_nn(x, params, block_b=block_b, out_dtype=out_dtype,
                              single_buffer_weights=False)

    if B_p != B or C_p != C:
        out_p = out_p[:B, :C]
    return out_p


def init_params(key, input_size, hidden_size, num_classes, dtype=jnp.float32):
    # Deterministic init mimicking PyTorch nn.Linear default
    # (U(-1/sqrt(fan_in), 1/sqrt(fan_in))), stored in (in, out) layout.
    k1, k2, k3, k4 = jax.random.split(key, 4)
    bound1 = 1.0 / float(input_size) ** 0.5
    bound2 = 1.0 / float(hidden_size) ** 0.5
    w1_t = jax.random.uniform(k1, (input_size, hidden_size), dtype, -bound1, bound1)
    b1 = jax.random.uniform(k2, (1, hidden_size), dtype, -bound1, bound1)
    w2_t = jax.random.uniform(k3, (hidden_size, num_classes), dtype, -bound2, bound2)
    b2 = jax.random.uniform(k4, (1, num_classes), dtype, -bound2, bound2)
    return w1_t, b1, w2_t, b2


if __name__ == "__main__":
    batch, input_size, hidden_size, num_classes = 8, 32, 64, 16

    key = jax.random.PRNGKey(0)
    kx, kp = jax.random.split(key)
    x = jax.random.normal(kx, (batch, input_size), jnp.float32)
    w1_t, b1, w2_t, b2 = init_params(kp, input_size, hidden_size, num_classes)

    # Pad/cast the weights once (cached across forward calls), then run.
    params = prepare_params(w1_t, b1, w2_t, b2)
    out = feedforward_nn(x, params)
    jax.block_until_ready(out)

    # Pure-JAX reference using the same bf16-matmul / f32-accumulate recipe.
    xb = x.astype(jnp.bfloat16)
    w1b = w1_t.astype(jnp.bfloat16)
    w2b = w2_t.astype(jnp.bfloat16)
    h_ref = jax.nn.sigmoid(
        jnp.dot(xb, w1b, preferred_element_type=jnp.float32) + b1)
    out_ref = jnp.dot(h_ref.astype(jnp.bfloat16), w2b,
                      preferred_element_type=jnp.float32) + b2

    assert out.shape == (batch, num_classes)
    assert out.dtype == x.dtype
    assert jnp.allclose(out.astype(jnp.float32), out_ref, atol=2e-2, rtol=2e-2), \
        float(jnp.max(jnp.abs(out.astype(jnp.float32) - out_ref)))

    print("KERNEL_OK")
</pallas_src>

<mosaic_0001>
module attributes {stable_mosaic.version = 11 : i64} {
  func.func @mlp_kernel(%arg0: i32, %arg1: memref<8x32xf32, #tpu.memory_space<vmem>>, %arg2: memref<32x128xbf16, #tpu.memory_space<vmem>>, %arg3: memref<1x128xf32, #tpu.memory_space<vmem>>, %arg4: memref<128x128xbf16, #tpu.memory_space<vmem>>, %arg5: memref<1x128xf32, #tpu.memory_space<vmem>>, %arg6: memref<8x128xf32, #tpu.memory_space<vmem>>) attributes {dimension_semantics = [#tpu.dimension_semantics<parallel>], iteration_bounds = array<i64: 1>, scalar_prefetch = 0 : i64, scratch_operands = 0 : i64, tpu.core_type = #tpu.core_type<tc>, window_params = [{transform_indices = @transform_0, window_bounds = array<i64: 8, 32>}, {pipeline_mode = #tpu.pipeline_mode<synchronous>, transform_indices = @transform_1, window_bounds = array<i64: 32, 128>}, {pipeline_mode = #tpu.pipeline_mode<synchronous>, transform_indices = @transform_2, window_bounds = array<i64: 1, 128>}, {pipeline_mode = #tpu.pipeline_mode<synchronous>, transform_indices = @transform_3, window_bounds = array<i64: 128, 128>}, {pipeline_mode = #tpu.pipeline_mode<synchronous>, transform_indices = @transform_4, window_bounds = array<i64: 1, 128>}, {transform_indices = @transform_5, window_bounds = array<i64: 8, 128>}]} {
    %c0 = arith.constant 0 : index
    %c0_0 = arith.constant 0 : index
    %0 = vector.load %arg1[%c0, %c0_0] : memref<8x32xf32, #tpu.memory_space<vmem>>, vector<8x32xf32>
    %1 = arith.truncf %0 : vector<8x32xf32> to vector<8x32xbf16>
    %cst = arith.constant 0.000000e+00 : f32
    %2 = vector.broadcast %cst : f32 to vector<8x128xf32>
    %c0_1 = arith.constant 0 : index
    %c0_2 = arith.constant 0 : index
    %3 = vector.load %arg2[%c0_1, %c0_2] : memref<32x128xbf16, #tpu.memory_space<vmem>>, vector<32x128xbf16>
    %cst_3 = arith.constant dense<0.000000e+00> : vector<8x128xf32>
    %4 = tpu.matmul %1, %3, %cst_3 {dimension_numbers = #tpu.dot_dimension_numbers<[1], [0], [0], [1], [0, 0, 1, 1], [], []>} : vector<8x32xbf16>, vector<32x128xbf16>, vector<8x128xf32> -> vector<8x128xf32>
    %c0_4 = arith.constant 0 : index
    %c0_5 = arith.constant 0 : index
    %5 = vector.load %arg3[%c0_4, %c0_5] : memref<1x128xf32, #tpu.memory_space<vmem>>, vector<1x128xf32>
    %6 = vector.broadcast %5 : vector<1x128xf32> to vector<8x128xf32>
    %7 = arith.addf %4, %6 : vector<8x128xf32>
    %cst_6 = arith.constant 5.000000e-01 : f32
    %8 = vector.broadcast %cst_6 : f32 to vector<8x128xf32>
    %9 = arith.mulf %8, %7 : vector<8x128xf32>
    %10 = math.tanh %9 : vector<8x128xf32>
    %cst_7 = arith.constant 1.000000e+00 : f32
    %11 = vector.broadcast %cst_7 : f32 to vector<8x128xf32>
    %12 = arith.addf %10, %11 : vector<8x128xf32>
    %cst_8 = arith.constant 5.000000e-01 : f32
    %13 = vector.broadcast %cst_8 : f32 to vector<8x128xf32>
    %14 = arith.mulf %13, %12 : vector<8x128xf32>
    %15 = arith.truncf %14 : vector<8x128xf32> to vector<8x128xbf16>
    %c0_9 = arith.constant 0 : index
    %c0_10 = arith.constant 0 : index
    %16 = vector.load %arg4[%c0_9, %c0_10] : memref<128x128xbf16, #tpu.memory_space<vmem>>, vector<128x128xbf16>
    %cst_11 = arith.constant dense<0.000000e+00> : vector<8x128xf32>
    %17 = tpu.matmul %15, %16, %cst_11 {dimension_numbers = #tpu.dot_dimension_numbers<[1], [0], [0], [1], [0, 0, 1, 1], [], []>} : vector<8x128xbf16>, vector<128x128xbf16>, vector<8x128xf32> -> vector<8x128xf32>
    %18 = arith.addf %2, %17 : vector<8x128xf32>
    %c0_12 = arith.constant 0 : index
    %c0_13 = arith.constant 0 : index
    %19 = vector.load %arg5[%c0_12, %c0_13] : memref<1x128xf32, #tpu.memory_space<vmem>>, vector<1x128xf32>
    %20 = vector.broadcast %19 : vector<1x128xf32> to vector<8x128xf32>
    %21 = arith.addf %18, %20 : vector<8x128xf32>
    %c0_14 = arith.constant 0 : index
    %c0_15 = arith.constant 0 : index
    %22 = vector.load %arg6[%c0_14, %c0_15] : memref<8x128xf32, #tpu.memory_space<vmem>>, vector<8x128xf32>
    tpu.vector_store %arg6[%c0_14, %c0_15], %21 {strides = array<i32>} : memref<8x128xf32, #tpu.memory_space<vmem>>, vector<8x128xf32>,
    return
  }
  func.func @transform_0(%arg0: i32) -> (i32, i32) {
    %c0_i32 = arith.constant 0 : i32
    %c0_i32_0 = arith.constant 0 : i32
    return %arg0, %c0_i32 : i32, i32
  }
  func.func @transform_1(%arg0: i32) -> (i32, i32) {
    %c0_i32 = arith.constant 0 : i32
    %c0_i32_0 = arith.constant 0 : i32
    %c0_i32_1 = arith.constant 0 : i32
    return %c0_i32, %c0_i32_0 : i32, i32
  }
  func.func @transform_2(%arg0: i32) -> (i32, i32) {
    %c0_i32 = arith.constant 0 : i32
    %c0_i32_0 = arith.constant 0 : i32
    %c0_i32_1 = arith.constant 0 : i32
    return %c0_i32, %c0_i32_0 : i32, i32
  }
  func.func @transform_3(%arg0: i32) -> (i32, i32) {
    %c0_i32 = arith.constant 0 : i32
    %c0_i32_0 = arith.constant 0 : i32
    %c0_i32_1 = arith.constant 0 : i32
    return %c0_i32, %c0_i32_0 : i32, i32
  }
  func.func @transform_4(%arg0: i32) -> (i32, i32) {
    %c0_i32 = arith.constant 0 : i32
    %c0_i32_0 = arith.constant 0 : i32
    %c0_i32_1 = arith.constant 0 : i32
    return %c0_i32, %c0_i32_0 : i32, i32
  }
  func.func @transform_5(%arg0: i32) -> (i32, i32) {
    %c0_i32 = arith.constant 0 : i32
    %c0_i32_0 = arith.constant 0 : i32
    return %arg0, %c0_i32 : i32, i32
  }
}

module attributes {stable_mosaic.version = 11 : i64} {
  func.func @mlp_kernel(%arg0: i32, %arg1: memref<8x32xf32, #tpu.memory_space<vmem>>, %arg2: memref<32x128xbf16, #tpu.memory_space<vmem>>, %arg3: memref<1x128xf32, #tpu.memory_space<vmem>>, %arg4: memref<128x128xbf16, #tpu.memory_space<vmem>>, %arg5: memref<1x128xf32, #tpu.memory_space<vmem>>, %arg6: memref<8x128xf32, #tpu.memory_space<vmem>>) attributes {dimension_semantics = [#tpu.dimension_semantics<parallel>], iteration_bounds = array<i64: 1>, scalar_prefetch = 0 : i64, scratch_operands = 0 : i64, tpu.core_type = #tpu.core_type<tc>, window_params = [{transform_indices = @transform_0, window_bounds = array<i64: 8, 32>}, {pipeline_mode = #tpu.pipeline_mode<synchronous>, transform_indices = @transform_1, window_bounds = array<i64: 32, 128>}, {pipeline_mode = #tpu.pipeline_mode<synchronous>, transform_indices = @transform_2, window_bounds = array<i64: 1, 128>}, {pipeline_mode = #tpu.pipeline_mode<synchronous>, transform_indices = @transform_3, window_bounds = array<i64: 128, 128>}, {pipeline_mode = #tpu.pipeline_mode<synchronous>, transform_indices = @transform_4, window_bounds = array<i64: 1, 128>}, {transform_indices = @transform_5, window_bounds = array<i64: 8, 128>}]} {
    %c0 = arith.constant 0 : index
    %c0_0 = arith.constant 0 : index
    %0 = vector.load %arg1[%c0, %c0_0] : memref<8x32xf32, #tpu.memory_space<vmem>>, vector<8x32xf32>
    %1 = arith.truncf %0 : vector<8x32xf32> to vector<8x32xbf16>
    %cst = arith.constant 0.000000e+00 : f32
    %2 = vector.broadcast %cst : f32 to vector<8x128xf32>
    %c0_1 = arith.constant 0 : index
    %c0_2 = arith.constant 0 : index
    %3 = vector.load %arg2[%c0_1, %c0_2] : memref<32x128xbf16, #tpu.memory_space<vmem>>, vector<32x128xbf16>
    %cst_3 = arith.constant dense<0.000000e+00> : vector<8x128xf32>
    %4 = tpu.matmul %1, %3, %cst_3 {dimension_numbers = #tpu.dot_dimension_numbers<[1], [0], [0], [1], [0, 0, 1, 1], [], []>} : vector<8x32xbf16>, vector<32x128xbf16>, vector<8x128xf32> -> vector<8x128xf32>
    %c0_4 = arith.constant 0 : index
    %c0_5 = arith.constant 0 : index
    %5 = vector.load %arg3[%c0_4, %c0_5] : memref<1x128xf32, #tpu.memory_space<vmem>>, vector<1x128xf32>
    %6 = vector.broadcast %5 : vector<1x128xf32> to vector<8x128xf32>
    %7 = arith.addf %4, %6 : vector<8x128xf32>
    %cst_6 = arith.constant 5.000000e-01 : f32
    %8 = vector.broadcast %cst_6 : f32 to vector<8x128xf32>
    %9 = arith.mulf %8, %7 : vector<8x128xf32>
    %10 = math.tanh %9 : vector<8x128xf32>
    %cst_7 = arith.constant 1.000000e+00 : f32
    %11 = vector.broadcast %cst_7 : f32 to vector<8x128xf32>
    %12 = arith.addf %10, %11 : vector<8x128xf32>
    %cst_8 = arith.constant 5.000000e-01 : f32
    %13 = vector.broadcast %cst_8 : f32 to vector<8x128xf32>
    %14 = arith.mulf %13, %12 : vector<8x128xf32>
    %15 = arith.truncf %14 : vector<8x128xf32> to vector<8x128xbf16>
    %c0_9 = arith.constant 0 : index
    %c0_10 = arith.constant 0 : index
    %16 = vector.load %arg4[%c0_9, %c0_10] : memref<128x128xbf16, #tpu.memory_space<vmem>>, vector<128x128xbf16>
    %cst_11 = arith.constant dense<0.000000e+00> : vector<8x128xf32>
    %17 = tpu.matmul %15, %16, %cst_11 {dimension_numbers = #tpu.dot_dimension_numbers<[1], [0], [0], [1], [0, 0, 1, 1], [], []>} : vector<8x128xbf16>, vector<128x128xbf16>, vector<8x128xf32> -> vector<8x128xf32>
    %18 = arith.addf %2, %17 : vector<8x128xf32>
    %c0_12 = arith.constant 0 : index
    %c0_13 = arith.constant 0 : index
    %19 = vector.load %arg5[%c0_12, %c0_13] : memref<1x128xf32, #tpu.memory_space<vmem>>, vector<1x128xf32>
    %20 = vector.broadcast %19 : vector<1x128xf32> to vector<8x128xf32>
    %21 = arith.addf %18, %20 : vector<8x128xf32>
    %c0_14 = arith.constant 0 : index
    %c0_15 = arith.constant 0 : index
    %22 = vector.load %arg6[%c0_14, %c0_15] : memref<8x128xf32, #tpu.memory_space<vmem>>, vector<8x128xf32>
    tpu.vector_store %arg6[%c0_14, %c0_15], %21 {strides = array<i32>} : memref<8x128xf32, #tpu.memory_space<vmem>>, vector<8x128xf32>,
    return
  }
  func.func @transform_0(%arg0: i32) -> (i32, i32) {
    %c0_i32 = arith.constant 0 : i32
    %c0_i32_0 = arith.constant 0 : i32
    return %arg0, %c0_i32 : i32, i32
  }
  func.func @transform_1(%arg0: i32) -> (i32, i32) {
    %c0_i32 = arith.constant 0 : i32
    %c0_i32_0 = arith.constant 0 : i32
    %c0_i32_1 = arith.constant 0 : i32
    return %c0_i32, %c0_i32_0 : i32, i32
  }
  func.func @transform_2(%arg0: i32) -> (i32, i32) {
    %c0_i32 = arith.constant 0 : i32
    %c0_i32_0 = arith.constant 0 : i32
    %c0_i32_1 = arith.constant 0 : i32
    return %c0_i32, %c0_i32_0 : i32, i32
  }
  func.func @transform_3(%arg0: i32) -> (i32, i32) {
    %c0_i32 = arith.constant 0 : i32
    %c0_i32_0 = arith.constant 0 : i32
    %c0_i32_1 = arith.constant 0 : i32
    return %c0_i32, %c0_i32_0 : i32, i32
  }
  func.func @transform_4(%arg0: i32) -> (i32, i32) {
    %c0_i32 = arith.constant 0 : i32
    %c0_i32_0 = arith.constant 0 : i32
    %c0_i32_1 = arith.constant 0 : i32
    return %c0_i32, %c0_i32_0 : i32, i32
  }
  func.func @transform_5(%arg0: i32) -> (i32, i32) {
    %c0_i32 = arith.constant 0 : i32
    %c0_i32_0 = arith.constant 0 : i32
    return %arg0, %c0_i32 : i32, i32
  }
}

</mosaic_0001>

<llo_original>
// kernel: tpu_custom_call.1
$region0: #{tpu_custom_call.1}
  #allocation0 [shape = 'u32[]', space=smem, size = 0x4, offset = 0x4, fixed_abs, tag = 'smem constant byte address 0x4 - core index']
  #allocation1 [shape = 'u32[72,128]{1,0:T(1,128)}', space=vmem, size = 0x9000, scoped, tag = 'internal scratch']
  %s0 = inlined_call_operand.hbm [shape: f32[8,32], index: 0, kind: input, shape index: {}]
  %s1 = inlined_call_operand.hbm [shape: bf16[32,128], index: 1, kind: input, shape index: {}]
  %s2 = inlined_call_operand.vmem [shape: f32[1,128], index: 2, kind: input, shape index: {}]
  %s3 = inlined_call_operand.hbm [shape: bf16[128,128], index: 3, kind: input, shape index: {}]
  %s4 = inlined_call_operand.vmem [shape: f32[1,128], index: 4, kind: input, shape index: {}]
  %s5 = inlined_call_operand.hbm [shape: f32[8,128], index: 5, kind: output, shape index: {}]
  %s6 = sld [smem:[#allocation0]]
  $region42: #{tpu_custom_call.1} parent=0
    _
  %s8 = ssub.s32 1, %s6
  %s9 = scalar_select 0, %s8, %s6
  $region1: #{tpu_custom_call.1} parent=0
    #allocation2 [shape = 'u8[4096]{0}', space=vmem, size = 0x1000, scoped, tag = 'input window, operand 0, single buffered']
    #allocation3 [shape = 's32[1]{0}', space=sflag, size = 0x4, scoped, tag = 'scoped memory for tpu_custom_call.1']
    #allocation4 [shape = 's32[1]{0}', space=sflag, size = 0x4, scoped, tag = 'scoped memory for tpu_custom_call.1']
    #allocation5 [shape = 'u8[8192]{0}', space=vmem, size = 0x2000, scoped, tag = 'input window, operand 1, single buffered']
    #allocation6 [shape = 's32[1]{0}', space=sflag, size = 0x4, scoped, tag = 'scoped memory for tpu_custom_call.1']
    #allocation7 [shape = 'u8[32768]{0}', space=vmem, size = 0x8000, scoped, tag = 'input window, operand 3, single buffered']
    #allocation8 [shape = 'u8[4096]{0}', space=vmem, size = 0x1000, scoped, tag = 'output window, operand 0, single buffered']
    %10 = vsyncpa [#allocation3], 0
    %11 = vsyncpa [#allocation6], 0
    %12 = vsyncpa [#allocation4], 0
    // Predicated region
    $region2: #{tpu_custom_call.1} parent=1 // pred_check
      _
    $region3: #{tpu_custom_call.1} parent=1 // pred_check_branch
      %14 = sbr.rel (0) target = $region5
    $region4: #{tpu_custom_call.1} parent=1 // pred_region
      %16 = vsyncadd [#allocation3], 0
      %s18 = sshll.u32 %s0, 4
      %s19 = int_to_ptr.hbm [resolvable:$true] %s18
      %s20 = sshll.u32 [#allocation2], 4
      %s21 = int_to_ptr.vmem [resolvable:$true] %s20
      %23 = dma.hbm_to_vmem [thread:$0]  %s19, 128, %s21, [#allocation3]
    $region5: #{tpu_custom_call.1} parent=1 // pred_fallthru
      _
    // Predicated region
    $region6: #{tpu_custom_call.1} parent=1 // pred_check
      _
    $region7: #{tpu_custom_call.1} parent=1 // pred_check_branch
      %25 = sbr.rel (0) target = $region9
    $region8: #{tpu_custom_call.1} parent=1 // pred_region
      %27 = vsyncadd [#allocation6], 0
      %s28 = sshll.u32 %s1, 4
      %s29 = int_to_ptr.hbm [resolvable:$true] %s28
      %s30 = sshll.u32 [#allocation5], 4
      %s31 = int_to_ptr.vmem [resolvable:$true] %s30
      %36 = dma.hbm_to_vmem [thread:$0]  %s29, 256, %s31, [#allocation6], 64, 64, 4
    $region9: #{tpu_custom_call.1} parent=1 // pred_fallthru
      _
    // Predicated region
    $region10: #{tpu_custom_call.1} parent=1 // pred_check
      _
    $region11: #{tpu_custom_call.1} parent=1 // pred_check_branch
      %38 = sbr.rel (0) target = $region13
    $region12: #{tpu_custom_call.1} parent=1 // pred_region
      _
    $region13: #{tpu_custom_call.1} parent=1 // pred_fallthru
      _
    // Predicated region
    $region14: #{tpu_custom_call.1} parent=1 // pred_check
      _
    $region15: #{tpu_custom_call.1} parent=1 // pred_check_branch
      %40 = sbr.rel (0) target = $region17
    $region16: #{tpu_custom_call.1} parent=1 // pred_region
      %42 = vsyncadd [#allocation6], 0
      %s43 = sshll.u32 %s3, 4
      %s44 = int_to_ptr.hbm [resolvable:$true] %s43
      %s45 = sshll.u32 [#allocation7], 4
      %s46 = int_to_ptr.vmem [resolvable:$true] %s45
      %51 = dma.hbm_to_vmem [thread:$0]  %s44, 1024, %s46, [#allocation6], 64, 64, 4
    $region17: #{tpu_custom_call.1} parent=1 // pred_fallthru
      _
    // Predicated region
    $region18: #{tpu_custom_call.1} parent=1 // pred_check
      _
    $region19: #{tpu_custom_call.1} parent=1 // pred_check_branch
      %53 = sbr.rel (0) target = $region21
    $region20: #{tpu_custom_call.1} parent=1 // pred_region
      _
    $region21: #{tpu_custom_call.1} parent=1 // pred_fallthru
      _
    // Predicated region
    $region22: #{tpu_custom_call.1} parent=1 // pred_check
      _
    $region23: #{tpu_custom_call.1} parent=1 // pred_check_branch
      %55 = sbr.rel (0) target = $region25
    $region24: #{tpu_custom_call.1} parent=1 // pred_region
      %57 = dma.done [#allocation3], 128
    $region25: #{tpu_custom_call.1} parent=1 // pred_fallthru
      _
    // Predicated region
    $region26: #{tpu_custom_call.1} parent=1 // pred_check
      _
    $region27: #{tpu_custom_call.1} parent=1 // pred_check_branch
      %59 = sbr.rel (0) target = $region29
    $region28: #{tpu_custom_call.1} parent=1 // pred_region
      %61 = dma.done [#allocation6], 256
    $region29: #{tpu_custom_call.1} parent=1 // pred_fallthru
      _
    // Predicated region
    $region30: #{tpu_custom_call.1} parent=1 // pred_check
      _
    $region31: #{tpu_custom_call.1} parent=1 // pred_check_branch
      %63 = sbr.rel (0) target = $region33
    $region32: #{tpu_custom_call.1} parent=1 // pred_region
      %65 = dma.done [#allocation6], 1024
    $region33: #{tpu_custom_call.1} parent=1 // pred_fallthru
      _
    %v67 = vld [vmem:[#allocation2] sm:$0xff]
    %v68 = vpack.c.bf16 %v67, %v67
    %v69 = vld [vmem:[#allocation5] sm:$0xf]
    %v70 = vld [vmem:[#allocation5 + $0x4] sm:$0xf]
    %v71 = vld [vmem:[#allocation5 + $0x8] sm:$0xf]
    %v72 = vld [vmem:[#allocation5 + $0xc] sm:$0xf]
    %v73 = vld [vmem:[%s2] sm:$0x1]
    %v75 = vperm.slane %v73, 0
    %v81 = vunpack.c.l.b16 %v69
    %v82 = vunpack.c.l.b16 %v70
    %v83 = vunpack.c.l.b16 %v71
    %v84 = vunpack.c.l.b16 %v72
    %v85 = vpack.c.b16 %v82, %v81
    %v86 = vpack.c.b16 %v84, %v83
    %vm89 = vcmask 261120
    %v91 = vsel %vm89, %v68, 0
    %93 = vmatpush.bf16.msra.mxu0 0
    %94 = vmatpush.bf16.msra.mxu0 0
    %95 = vmatpush.bf16.msra.mxu0 0
    %96 = vmatpush.bf16.msra.mxu0 0
    %97 = vmatpush.bf16.msra.mxu0 0
    %98 = vmatpush.bf16.msra.mxu0 0
    %99 = vmatpush.bf16.msra.mxu0 %v86
    %100 = vmatpush.bf16.msra.mxu0 %v85
    %101 = vmatmul.bf16.gmra.mxu0 %v91
    %v102 = vpop.f32.mrf.mxu0
    %v103 = vadd.f32 %v75, %v102
    %v104 = vpop.f32.mrf.mxu0
    %105 = vdwg.mxu0
    %v106 = vmul.f32 %v103, 0.5
    %v107 = vtanh.pop %v106
    %v108 = vadd.f32 %v107, 1.0
    %v109 = vmul.f32 %v108, 0.5
    %v110 = vpack.c.bf16 %v109, %v109
    %v111 = vld [vmem:[#allocation7] sm:$0xf]
    %v112 = vld [vmem:[#allocation7 + $0x4] sm:$0xf]
    %v113 = vld [vmem:[#allocation7 + $0x8] sm:$0xf]
    %v114 = vld [vmem:[#allocation7 + $0xc] sm:$0xf]
    %v115 = vld [vmem:[#allocation7 + $0x10] sm:$0xf]
    %v116 = vld [vmem:[#allocation7 + $0x14] sm:$0xf]
    %v117 = vld [vmem:[#allocation7 + $0x18] sm:$0xf]
    %v118 = vld [vmem:[#allocation7 + $0x1c] sm:$0xf]
    %v119 = vld [vmem:[#allocation7 + $0x20] sm:$0xf]
    %v120 = vld [vmem:[#allocation7 + $0x24] sm:$0xf]
    %v121 = vld [vmem:[#allocation7 + $0x28] sm:$0xf]
    %v122 = vld [vmem:[#allocation7 + $0x2c] sm:$0xf]
    %v123 = vld [vmem:[#allocation7 + $0x30] sm:$0xf]
    %v124 = vld [vmem:[#allocation7 + $0x34] sm:$0xf]
    %v125 = vld [vmem:[#allocation7 + $0x38] sm:$0xf]
    %v126 = vld [vmem:[#allocation7 + $0x3c] sm:$0xf]
    %v127 = vld [vmem:[%s4] sm:$0x1]
    %v129 = vperm.slane %v127, 0
    %v147 = vunpack.c.l.b16 %v111
    %v148 = vunpack.c.l.b16 %v112
    %v149 = vunpack.c.l.b16 %v113
    %v150 = vunpack.c.l.b16 %v114
    %v151 = vunpack.c.l.b16 %v115
    %v152 = vunpack.c.l.b16 %v116
    %v153 = vunpack.c.l.b16 %v117
    %v154 = vunpack.c.l.b16 %v118
    %v155 = vunpack.c.l.b16 %v119
    %v156 = vunpack.c.l.b16 %v120
    %v157 = vunpack.c.l.b16 %v121
    %v158 = vunpack.c.l.b16 %v122
    %v159 = vunpack.c.l.b16 %v123
    %v160 = vunpack.c.l.b16 %v124
    %v161 = vunpack.c.l.b16 %v125
    %v162 = vunpack.c.l.b16 %v126
    %v163 = vpack.c.b16 %v148, %v147
    %v164 = vpack.c.b16 %v150, %v149
    %v165 = vpack.c.b16 %v152, %v151
    %v166 = vpack.c.b16 %v154, %v153
    %v167 = vpack.c.b16 %v156, %v155
    %v168 = vpack.c.b16 %v158, %v157
    %v169 = vpack.c.b16 %v160, %v159
    %v170 = vpack.c.b16 %v162, %v161
    %179 = vmatpush.bf16.msra.mxu0 %v170
    %180 = vmatpush.bf16.msra.mxu0 %v169
    %181 = vmatpush.bf16.msra.mxu0 %v168
    %182 = vmatpush.bf16.msra.mxu0 %v167
    %183 = vmatpush.bf16.msra.mxu0 %v166
    %184 = vmatpush.bf16.msra.mxu0 %v165
    %185 = vmatpush.bf16.msra.mxu0 %v164
    %186 = vmatpush.bf16.msra.mxu0 %v163
    %187 = vmatmul.bf16.gmra.mxu0 %v110
    %v188 = vpop.f32.mrf.mxu0
    %v189 = vadd.f32 %v129, %v188
    %v190 = vpop.f32.mrf.mxu0
    %191 = vdwg.mxu0
    %192 = vst [vmem:[#allocation8] sm:$0xff] %v189
    // Predicated region
    $region34: #{tpu_custom_call.1} parent=1 // pred_check
      _
    $region35: #{tpu_custom_call.1} parent=1 // pred_check_branch
      %194 = sbr.rel (0) target = $region37
    $region36: #{tpu_custom_call.1} parent=1 // pred_region
      %196 = vsyncadd [#allocation4], 0
      %s198 = sshll.u32 [#allocation8], 4
      %s199 = int_to_ptr.vmem [resolvable:$true] %s198
      %s200 = sshll.u32 %s5, 4
      %s201 = int_to_ptr.hbm [resolvable:$true] %s200
      %203 = dma.vmem_to_hbm [thread:$0]  %s199, 128, %s201, [#allocation4]
    $region37: #{tpu_custom_call.1} parent=1 // pred_fallthru
      _
    // Predicated region
    $region38: #{tpu_custom_call.1} parent=1 // pred_check
      _
    $region39: #{tpu_custom_call.1} parent=1 // pred_check_branch
      %205 = sbr.rel (0) target = $region41
    $region40: #{tpu_custom_call.1} parent=1 // pred_region
      %207 = dma.done [#allocation4], 128
    $region41: #{tpu_custom_call.1} parent=1 // pred_fallthru
      _
    %208 = vsyncpa [#allocation3], 1
    %209 = vsyncpa [#allocation6], 1
    %210 = vsyncpa [#allocation4], 1

// kernel: tpu_custom_call.1
$region0: #{tpu_custom_call.1}
  #allocation0 [shape = 'u32[]', space=smem, size = 0x4, offset = 0x4, fixed_abs, tag = 'smem constant byte address 0x4 - core index']
  #allocation1 [shape = 'u32[72,128]{1,0:T(1,128)}', space=vmem, size = 0x9000, scoped, tag = 'internal scratch']
  %s0 = inlined_call_operand.hbm [shape: f32[8,32], index: 0, kind: input, shape index: {}]
  %s1 = inlined_call_operand.hbm [shape: bf16[32,128], index: 1, kind: input, shape index: {}]
  %s2 = inlined_call_operand.vmem [shape: f32[1,128], index: 2, kind: input, shape index: {}]
  %s3 = inlined_call_operand.hbm [shape: bf16[128,128], index: 3, kind: input, shape index: {}]
  %s4 = inlined_call_operand.vmem [shape: f32[1,128], index: 4, kind: input, shape index: {}]
  %s5 = inlined_call_operand.hbm [shape: f32[8,128], index: 5, kind: output, shape index: {}]
  %s6 = sld [smem:[#allocation0]]
  $region42: #{tpu_custom_call.1} parent=0
    _
  %s8 = ssub.s32 1, %s6
  %s9 = scalar_select 0, %s8, %s6
  $region1: #{tpu_custom_call.1} parent=0
    #allocation2 [shape = 'u8[4096]{0}', space=vmem, size = 0x1000, scoped, tag = 'input window, operand 0, single buffered']
    #allocation3 [shape = 's32[1]{0}', space=sflag, size = 0x4, scoped, tag = 'scoped memory for tpu_custom_call.1']
    #allocation4 [shape = 's32[1]{0}', space=sflag, size = 0x4, scoped, tag = 'scoped memory for tpu_custom_call.1']
    #allocation5 [shape = 'u8[8192]{0}', space=vmem, size = 0x2000, scoped, tag = 'input window, operand 1, single buffered']
    #allocation6 [shape = 's32[1]{0}', space=sflag, size = 0x4, scoped, tag = 'scoped memory for tpu_custom_call.1']
    #allocation7 [shape = 'u8[32768]{0}', space=vmem, size = 0x8000, scoped, tag = 'input window, operand 3, single buffered']
    #allocation8 [shape = 'u8[4096]{0}', space=vmem, size = 0x1000, scoped, tag = 'output window, operand 0, single buffered']
    %10 = vsyncpa [#allocation3], 0
    %11 = vsyncpa [#allocation6], 0
    %12 = vsyncpa [#allocation4], 0
    // Predicated region
    $region2: #{tpu_custom_call.1} parent=1 // pred_check
      _
    $region3: #{tpu_custom_call.1} parent=1 // pred_check_branch
      %14 = sbr.rel (0) target = $region5
    $region4: #{tpu_custom_call.1} parent=1 // pred_region
      %16 = vsyncadd [#allocation3], 0
      %s18 = sshll.u32 %s0, 4
      %s19 = int_to_ptr.hbm [resolvable:$true] %s18
      %s20 = sshll.u32 [#allocation2], 4
      %s21 = int_to_ptr.vmem [resolvable:$true] %s20
      %23 = dma.hbm_to_vmem [thread:$0]  %s19, 128, %s21, [#allocation3]
    $region5: #{tpu_custom_call.1} parent=1 // pred_fallthru
      _
    // Predicated region
    $region6: #{tpu_custom_call.1} parent=1 // pred_check
      _
    $region7: #{tpu_custom_call.1} parent=1 // pred_check_branch
      %25 = sbr.rel (0) target = $region9
    $region8: #{tpu_custom_call.1} parent=1 // pred_region
      %27 = vsyncadd [#allocation6], 0
      %s28 = sshll.u32 %s1, 4
      %s29 = int_to_ptr.hbm [resolvable:$true] %s28
      %s30 = sshll.u32 [#allocation5], 4
      %s31 = int_to_ptr.vmem [resolvable:$true] %s30
      %36 = dma.hbm_to_vmem [thread:$0]  %s29, 256, %s31, [#allocation6], 64, 64, 4
    $region9: #{tpu_custom_call.1} parent=1 // pred_fallthru
      _
    // Predicated region
    $region10: #{tpu_custom_call.1} parent=1 // pred_check
      _
    $region11: #{tpu_custom_call.1} parent=1 // pred_check_branch
      %38 = sbr.rel (0) target = $region13
    $region12: #{tpu_custom_call.1} parent=1 // pred_region
      _
    $region13: #{tpu_custom_call.1} parent=1 // pred_fallthru
      _
    // Predicated region
    $region14: #{tpu_custom_call.1} parent=1 // pred_check
      _
    $region15: #{tpu_custom_call.1} parent=1 // pred_check_branch
      %40 = sbr.rel (0) target = $region17
    $region16: #{tpu_custom_call.1} parent=1 // pred_region
      %42 = vsyncadd [#allocation6], 0
      %s43 = sshll.u32 %s3, 4
      %s44 = int_to_ptr.hbm [resolvable:$true] %s43
      %s45 = sshll.u32 [#allocation7], 4
      %s46 = int_to_ptr.vmem [resolvable:$true] %s45
      %51 = dma.hbm_to_vmem [thread:$0]  %s44, 1024, %s46, [#allocation6], 64, 64, 4
    $region17: #{tpu_custom_call.1} parent=1 // pred_fallthru
      _
    // Predicated region
    $region18: #{tpu_custom_call.1} parent=1 // pred_check
      _
    $region19: #{tpu_custom_call.1} parent=1 // pred_check_branch
      %53 = sbr.rel (0) target = $region21
    $region20: #{tpu_custom_call.1} parent=1 // pred_region
      _
    $region21: #{tpu_custom_call.1} parent=1 // pred_fallthru
      _
    // Predicated region
    $region22: #{tpu_custom_call.1} parent=1 // pred_check
      _
    $region23: #{tpu_custom_call.1} parent=1 // pred_check_branch
      %55 = sbr.rel (0) target = $region25
    $region24: #{tpu_custom_call.1} parent=1 // pred_region
      %57 = dma.done [#allocation3], 128
    $region25: #{tpu_custom_call.1} parent=1 // pred_fallthru
      _
    // Predicated region
    $region26: #{tpu_custom_call.1} parent=1 // pred_check
      _
    $region27: #{tpu_custom_call.1} parent=1 // pred_check_branch
      %59 = sbr.rel (0) target = $region29
    $region28: #{tpu_custom_call.1} parent=1 // pred_region
      %61 = dma.done [#allocation6], 256
    $region29: #{tpu_custom_call.1} parent=1 // pred_fallthru
      _
    // Predicated region
    $region30: #{tpu_custom_call.1} parent=1 // pred_check
      _
    $region31: #{tpu_custom_call.1} parent=1 // pred_check_branch
      %63 = sbr.rel (0) target = $region33
    $region32: #{tpu_custom_call.1} parent=1 // pred_region
      %65 = dma.done [#allocation6], 1024
    $region33: #{tpu_custom_call.1} parent=1 // pred_fallthru
      _
    %v67 = vld [vmem:[#allocation2] sm:$0xff]
    %v68 = vpack.c.bf16 %v67, %v67
    %v69 = vld [vmem:[#allocation5] sm:$0xf]
    %v70 = vld [vmem:[#allocation5 + $0x4] sm:$0xf]
    %v71 = vld [vmem:[#allocation5 + $0x8] sm:$0xf]
    %v72 = vld [vmem:[#allocation5 + $0xc] sm:$0xf]
    %v73 = vld [vmem:[%s2] sm:$0x1]
    %v75 = vperm.slane %v73, 0
    %v81 = vunpack.c.l.b16 %v69
    %v82 = vunpack.c.l.b16 %v70
    %v83 = vunpack.c.l.b16 %v71
    %v84 = vunpack.c.l.b16 %v72
    %v85 = vpack.c.b16 %v82, %v81
    %v86 = vpack.c.b16 %v84, %v83
    %vm89 = vcmask 261120
    %v91 = vsel %vm89, %v68, 0
    %93 = vmatpush.bf16.msra.mxu0 0
    %94 = vmatpush.bf16.msra.mxu0 0
    %95 = vmatpush.bf16.msra.mxu0 0
    %96 = vmatpush.bf16.msra.mxu0 0
    %97 = vmatpush.bf16.msra.mxu0 0
    %98 = vmatpush.bf16.msra.mxu0 0
    %99 = vmatpush.bf16.msra.mxu0 %v86
    %100 = vmatpush.bf16.msra.mxu0 %v85
    %101 = vmatmul.bf16.gmra.mxu0 %v91
    %v102 = vpop.f32.mrf.mxu0
    %v103 = vadd.f32 %v75, %v102
    %v104 = vpop.f32.mrf.mxu0
    %105 = vdwg.mxu0
    %v106 = vmul.f32 %v103, 0.5
    %v107 = vtanh.pop %v106
    %v108 = vadd.f32 %v107, 1.0
    %v109 = vmul.f32 %v108, 0.5
    %v110 = vpack.c.bf16 %v109, %v109
    %v111 = vld [vmem:[#allocation7] sm:$0xf]
    %v112 = vld [vmem:[#allocation7 + $0x4] sm:$0xf]
    %v113 = vld [vmem:[#allocation7 + $0x8] sm:$0xf]
    %v114 = vld [vmem:[#allocation7 + $0xc] sm:$0xf]
    %v115 = vld [vmem:[#allocation7 + $0x10] sm:$0xf]
    %v116 = vld [vmem:[#allocation7 + $0x14] sm:$0xf]
    %v117 = vld [vmem:[#allocation7 + $0x18] sm:$0xf]
    %v118 = vld [vmem:[#allocation7 + $0x1c] sm:$0xf]
    %v119 = vld [vmem:[#allocation7 + $0x20] sm:$0xf]
    %v120 = vld [vmem:[#allocation7 + $0x24] sm:$0xf]
    %v121 = vld [vmem:[#allocation7 + $0x28] sm:$0xf]
    %v122 = vld [vmem:[#allocation7 + $0x2c] sm:$0xf]
    %v123 = vld [vmem:[#allocation7 + $0x30] sm:$0xf]
    %v124 = vld [vmem:[#allocation7 + $0x34] sm:$0xf]
    %v125 = vld [vmem:[#allocation7 + $0x38] sm:$0xf]
    %v126 = vld [vmem:[#allocation7 + $0x3c] sm:$0xf]
    %v127 = vld [vmem:[%s4] sm:$0x1]
    %v129 = vperm.slane %v127, 0
    %v147 = vunpack.c.l.b16 %v111
    %v148 = vunpack.c.l.b16 %v112
    %v149 = vunpack.c.l.b16 %v113
    %v150 = vunpack.c.l.b16 %v114
    %v151 = vunpack.c.l.b16 %v115
    %v152 = vunpack.c.l.b16 %v116
    %v153 = vunpack.c.l.b16 %v117
    %v154 = vunpack.c.l.b16 %v118
    %v155 = vunpack.c.l.b16 %v119
    %v156 = vunpack.c.l.b16 %v120
    %v157 = vunpack.c.l.b16 %v121
    %v158 = vunpack.c.l.b16 %v122
    %v159 = vunpack.c.l.b16 %v123
    %v160 = vunpack.c.l.b16 %v124
    %v161 = vunpack.c.l.b16 %v125
    %v162 = vunpack.c.l.b16 %v126
    %v163 = vpack.c.b16 %v148, %v147
    %v164 = vpack.c.b16 %v150, %v149
    %v165 = vpack.c.b16 %v152, %v151
    %v166 = vpack.c.b16 %v154, %v153
    %v167 = vpack.c.b16 %v156, %v155
    %v168 = vpack.c.b16 %v158, %v157
    %v169 = vpack.c.b16 %v160, %v159
    %v170 = vpack.c.b16 %v162, %v161
    %179 = vmatpush.bf16.msra.mxu0 %v170
    %180 = vmatpush.bf16.msra.mxu0 %v169
    %181 = vmatpush.bf16.msra.mxu0 %v168
    %182 = vmatpush.bf16.msra.mxu0 %v167
    %183 = vmatpush.bf16.msra.mxu0 %v166
    %184 = vmatpush.bf16.msra.mxu0 %v165
    %185 = vmatpush.bf16.msra.mxu0 %v164
    %186 = vmatpush.bf16.msra.mxu0 %v163
    %187 = vmatmul.bf16.gmra.mxu0 %v110
    %v188 = vpop.f32.mrf.mxu0
    %v189 = vadd.f32 %v129, %v188
    %v190 = vpop.f32.mrf.mxu0
    %191 = vdwg.mxu0
    %192 = vst [vmem:[#allocation8] sm:$0xff] %v189
    // Predicated region
    $region34: #{tpu_custom_call.1} parent=1 // pred_check
      _
    $region35: #{tpu_custom_call.1} parent=1 // pred_check_branch
      %194 = sbr.rel (0) target = $region37
    $region36: #{tpu_custom_call.1} parent=1 // pred_region
      %196 = vsyncadd [#allocation4], 0
      %s198 = sshll.u32 [#allocation8], 4
      %s199 = int_to_ptr.vmem [resolvable:$true] %s198
      %s200 = sshll.u32 %s5, 4
      %s201 = int_to_ptr.hbm [resolvable:$true] %s200
      %203 = dma.vmem_to_hbm [thread:$0]  %s199, 128, %s201, [#allocation4]
    $region37: #{tpu_custom_call.1} parent=1 // pred_fallthru
      _
    // Predicated region
    $region38: #{tpu_custom_call.1} parent=1 // pred_check
      _
    $region39: #{tpu_custom_call.1} parent=1 // pred_check_branch
      %205 = sbr.rel (0) target = $region41
    $region40: #{tpu_custom_call.1} parent=1 // pred_region
      %207 = dma.done [#allocation4], 128
    $region41: #{tpu_custom_call.1} parent=1 // pred_fallthru
      _
    %208 = vsyncpa [#allocation3], 1
    %209 = vsyncpa [#allocation6], 1
    %210 = vsyncpa [#allocation4], 1

</llo_original>
